<compile_context>
chip_gen: v5e
topology: v5e:2x2
jax: 0.10.0
libtpu: 0.0.40
codegen_flags: <defaults>
</compile_context>

<pallas_src>
import functools

import numpy as np
import jax
import jax.numpy as jnp
from jax.experimental import pallas as pl
from jax.experimental.pallas import tpu as pltpu

_LANE = 128
_MAX_TILE_ROWS = 4096   # (4096, 128) f32 = 2 MiB per stream per block


def _cdiv(a, b):
    return -(-a // b)


def _round_up(a, b):
    return _cdiv(a, b) * b


def _sublane_multiple(dtype):
    # Minimum sublane granularity per packed dtype: f32 -> 8, bf16 -> 16, int8/bool -> 32.
    return {4: 8, 2: 16, 1: 32}.get(jnp.dtype(dtype).itemsize, 8)


def _ohem_bce_partials_kernel(x_ref, y_ref, sum_ref, cnt_ref, *,
                              thresh, valid_in_last, last_tile_masked):
    # Upcast per-vreg inside the kernel; inputs stream in their native dtype.
    x = x_ref[...].astype(jnp.float32)
    y = y_ref[...].astype(jnp.float32)
    # BCEWithLogitsLoss(reduction='none'), numerically stable form:
    #   max(x, 0) - x*y + log1p(exp(-|x|))
    loss = jnp.maximum(x, 0.0) - x * y + jnp.log1p(jnp.exp(-jnp.abs(x)))
    tr, tc = loss.shape
    gt = loss > thresh

    def reduce_and_store(mask):
        contrib = jnp.where(mask, loss, 0.0)
        if tr % 8 == 0:
            # VPU-only reduce: fold sublane groups of 8 on top of each other,
            # keeping the partials at the native (8, 128) vreg shape.
            sum_ref[0] = jnp.sum(contrib.reshape(tr // 8, 8, tc), axis=0)
            cnt_ref[0] = jnp.sum(mask.astype(jnp.int32).reshape(tr // 8, 8, tc), axis=0)
        else:
            # Single odd-row tile fallback: full sublane reduce, result in row 0.
            row = jax.lax.broadcasted_iota(jnp.int32, (8, tc), 0)
            s = jnp.sum(contrib, axis=0, keepdims=True)
            n = jnp.sum(mask.astype(jnp.int32), axis=0, keepdims=True)
            sum_ref[0] = jnp.where(row == 0, jnp.broadcast_to(s, (8, tc)), 0.0)
            cnt_ref[0] = jnp.where(row == 0, jnp.broadcast_to(n, (8, tc)), 0)

    if last_tile_masked:
        i = pl.program_id(0)
        last = pl.num_programs(0) - 1

        @pl.when(i != last)
        def _interior():
            reduce_and_store(gt)

        @pl.when(i == last)
        def _last():
            # Mask wrapper zero-padding and out-of-bounds (garbage) rows of the
            # ragged last block; interior tiles skip this work entirely.
            r = jax.lax.broadcasted_iota(jnp.int32, (tr, tc), 0)
            c = jax.lax.broadcasted_iota(jnp.int32, (tr, tc), 1)
            valid = (r * tc + c) < valid_in_last
            reduce_and_store(jnp.logical_and(gt, valid))
    else:
        reduce_and_store(gt)


def ohem_bce_loss(logits, labels, thresh, n_min):
    """Matches OhemBCELoss(thresh, n_min).forward(logits, labels)."""
    thresh_val = float(-np.log(thresh))
    m = int(np.prod(logits.shape))
    n_min = int(n_min)
    assert 0 < n_min < m, "need 0 < n_min < number of elements"
    assert m < 2 ** 31, "int32 hard-example count would overflow"

    x_flat = logits.reshape(-1)
    y_flat = labels.reshape(-1)

    # Lane-dense (rows, 128) slab.  The reshape is free when m is already a
    # 128-multiple; otherwise pad only the <=127 element remainder.  No full
    # slab pad and no wrapper-side dtype cast (casts happen in-kernel).
    m_pad = _round_up(m, _LANE)
    rows = m_pad // _LANE
    x2d, y2d = x_flat, y_flat
    if m_pad > m:
        x2d = jnp.pad(x_flat, (0, m_pad - m))
        y2d = jnp.pad(y_flat, (0, m_pad - m))
    x2d = x2d.reshape(rows, _LANE)
    y2d = y2d.reshape(rows, _LANE)

    sub = max(_sublane_multiple(x2d.dtype), _sublane_multiple(y2d.dtype))
    num_tiles = _cdiv(rows, _MAX_TILE_ROWS)
    if num_tiles == 1:
        tile_rows = rows   # block == full array dim: legal for any row count
    else:
        tile_rows = _round_up(_cdiv(rows, num_tiles), sub)

    # All padding / out-of-bounds rows must land in the last grid block.
    valid_in_last = m - (num_tiles - 1) * tile_rows * _LANE
    assert 0 < valid_in_last <= tile_rows * _LANE
    last_tile_masked = num_tiles * tile_rows * _LANE > m

    kernel = functools.partial(
        _ohem_bce_partials_kernel,
        thresh=thresh_val,
        valid_in_last=valid_in_last,
        last_tile_masked=last_tile_masked,
    )

    sum_p, cnt_p = pl.pallas_call(
        kernel,
        grid=(num_tiles,),
        in_specs=[
            pl.BlockSpec((tile_rows, _LANE), lambda i: (i, 0)),
            pl.BlockSpec((tile_rows, _LANE), lambda i: (i, 0)),
        ],
        out_specs=[
            pl.BlockSpec((1, 8, _LANE), lambda i: (i, 0, 0)),
            pl.BlockSpec((1, 8, _LANE), lambda i: (i, 0, 0)),
        ],
        out_shape=[
            jax.ShapeDtypeStruct((num_tiles, 8, _LANE), jnp.float32),
            jax.ShapeDtypeStruct((num_tiles, 8, _LANE), jnp.int32),
        ],
        compiler_params=pltpu.CompilerParams(
            dimension_semantics=("parallel",)),
    )(x2d, y2d)

    cnt_gt = jnp.sum(cnt_p)          # exact int32 count of loss > thresh
    sum_gt = jnp.sum(sum_p)          # f32 sum of those losses

    def _mean_hard():
        # Hard branch: cnt_gt >= n_min + 1 >= 1, so no div-by-zero.
        return sum_gt / cnt_gt.astype(jnp.float32)

    def _mean_topk():
        # Rare branch: the kernel no longer writes the loss map, so recompute
        # BCE lazily here and select the top n_min elements.
        # TODO(synk): descending sort / top-k has no clean Pallas-TPU kernel
        # equivalent; jax.lax.top_k runs only when this branch is taken.
        xf = x_flat.astype(jnp.float32)
        yf = y_flat.astype(jnp.float32)
        lf = jnp.maximum(xf, 0.0) - xf * yf + jnp.log1p(jnp.exp(-jnp.abs(xf)))
        vals, _ = jax.lax.top_k(lf, n_min)
        return jnp.sum(vals) / jnp.float32(n_min)

    # loss_sorted[n_min] > thresh  <=>  count(loss > thresh) > n_min (strict).
    return jax.lax.cond(cnt_gt > n_min, _mean_hard, _mean_topk)


def _ohem_bce_ref(logits, labels, thresh, n_min):
    """Pure-JAX reference mirroring the PyTorch module."""
    x = logits.reshape(-1).astype(jnp.float32)
    y = labels.reshape(-1).astype(jnp.float32)
    loss = jnp.maximum(x, 0.0) - x * y + jnp.log1p(jnp.exp(-jnp.abs(x)))
    thr = jnp.float32(-np.log(thresh))
    loss_sorted = jnp.sort(loss)[::-1]
    hard = loss_sorted[n_min] > thr
    gt = loss > thr
    mean_hard = jnp.sum(jnp.where(gt, loss, 0.0)) / jnp.maximum(jnp.sum(gt), 1)
    mean_topk = jnp.mean(loss_sorted[:n_min])
    return jnp.where(hard, mean_hard, mean_topk)


if __name__ == "__main__":
    key = jax.random.PRNGKey(0)
    k1, k2, k3, k4, k5, k6 = jax.random.split(key, 6)

    # Case 1: small 128-aligned NCHW input (zero-copy wrapper path);
    # common "hard examples > thresh" branch.
    shape1 = (2, 4, 16, 16)
    logits1 = jax.random.normal(k1, shape1, dtype=jnp.float32)
    labels1 = (jax.random.uniform(k2, shape1) > 0.5).astype(jnp.float32)
    n_min1 = shape1[0] * shape1[2] * shape1[3] // 16  # 32
    out1 = ohem_bce_loss(logits1, labels1, 0.7, n_min1)
    ref1 = _ohem_bce_ref(logits1, labels1, 0.7, n_min1)

    # Case 2: non-128-multiple element count (124-element pad, single odd-row
    # tile, fallback reduction); exercises the rare top-k branch.
    shape2 = (3, 4, 131, 171)
    logits2 = jax.random.normal(k3, shape2, dtype=jnp.float32)
    labels2 = (jax.random.uniform(k4, shape2) > 0.5).astype(jnp.float32)
    n_min2 = int(np.prod(shape2)) // 16
    out2 = ohem_bce_loss(logits2, labels2, 0.05, n_min2)
    ref2 = _ohem_bce_ref(logits2, labels2, 0.05, n_min2)

    # Case 3: multi-tile grid with a partially out-of-bounds (masked) last
    # block; hard branch.
    shape3 = (2, 5, 240, 240)
    logits3 = jax.random.normal(k5, shape3, dtype=jnp.float32)
    labels3 = (jax.random.uniform(k6, shape3) > 0.5).astype(jnp.float32)
    n_min3 = int(np.prod(shape3)) // 16
    out3 = ohem_bce_loss(logits3, labels3, 0.7, n_min3)
    ref3 = _ohem_bce_ref(logits3, labels3, 0.7, n_min3)

    jax.block_until_ready((out1, out2, out3))
    np.testing.assert_allclose(np.asarray(out1), np.asarray(ref1),
                               rtol=5e-4, atol=1e-5)
    np.testing.assert_allclose(np.asarray(out2), np.asarray(ref2),
                               rtol=5e-4, atol=1e-5)
    np.testing.assert_allclose(np.asarray(out3), np.asarray(ref3),
                               rtol=5e-4, atol=1e-5)
    print("KERNEL_OK")
</pallas_src>

<mosaic_0001>
module attributes {stable_mosaic.version = 11 : i64} {
  func.func @_ohem_bce_partials_kernel(%arg0: i32, %arg1: memref<16x128xf32, #tpu.memory_space<vmem>>, %arg2: memref<16x128xf32, #tpu.memory_space<vmem>>, %arg3: memref<1x8x128xf32, #tpu.memory_space<vmem>>, %arg4: memref<1x8x128xi32, #tpu.memory_space<vmem>>) attributes {dimension_semantics = [#tpu.dimension_semantics<parallel>], iteration_bounds = array<i64: 1>, scalar_prefetch = 0 : i64, scratch_operands = 0 : i64, tpu.core_type = #tpu.core_type<tc>, window_params = [{transform_indices = @transform_0, window_bounds = array<i64: 16, 128>}, {transform_indices = @transform_1, window_bounds = array<i64: 16, 128>}, {transform_indices = @transform_2, window_bounds = array<i64: 1, 8, 128>}, {transform_indices = @transform_3, window_bounds = array<i64: 1, 8, 128>}]} {
    %c0 = arith.constant 0 : index
    %c0_0 = arith.constant 0 : index
    %0 = vector.load %arg1[%c0, %c0_0] : memref<16x128xf32, #tpu.memory_space<vmem>>, vector<16x128xf32>
    %c0_1 = arith.constant 0 : index
    %c0_2 = arith.constant 0 : index
    %1 = vector.load %arg2[%c0_1, %c0_2] : memref<16x128xf32, #tpu.memory_space<vmem>>, vector<16x128xf32>
    %cst = arith.constant 0.000000e+00 : f32
    %2 = vector.broadcast %cst : f32 to vector<16x128xf32>
    %3 = arith.maximumf %0, %2 : vector<16x128xf32>
    %4 = arith.mulf %0, %1 : vector<16x128xf32>
    %5 = arith.subf %3, %4 : vector<16x128xf32>
    %6 = math.absf %0 : vector<16x128xf32>
    %cst_3 = arith.constant 0.000000e+00 : f32
    %7 = vector.broadcast %cst_3 : f32 to vector<16x128xf32>
    %8 = arith.subf %7, %6 : vector<16x128xf32>
    %9 = math.exp %8 : vector<16x128xf32>
    %10 = math.log1p %9 : vector<16x128xf32>
    %11 = arith.addf %5, %10 : vector<16x128xf32>
    %cst_4 = arith.constant 0.356674939 : f32
    %12 = vector.broadcast %cst_4 : f32 to vector<16x128xf32>
    %13 = arith.cmpf ogt, %11, %12 : vector<16x128xf32>
    %cst_5 = arith.constant 0.000000e+00 : f32
    %14 = vector.broadcast %cst_5 : f32 to vector<16x128xf32>
    %15 = arith.select %13, %11, %14 : vector<16x128xi1>, vector<16x128xf32>
    %16 = vector.shape_cast %15 : vector<16x128xf32> to vector<2x8x128xf32>
    %cst_6 = arith.constant dense<0.000000e+00> : vector<8x128xf32>
    %17 = vector.multi_reduction <add>, %16, %cst_6 [0] : vector<2x8x128xf32> to vector<8x128xf32>
    %c0_7 = arith.constant 0 : index
    %c0_8 = arith.constant 0 : index
    %c0_9 = arith.constant 0 : index
    %18 = vector.load %arg3[%c0_7, %c0_8, %c0_9] : memref<1x8x128xf32, #tpu.memory_space<vmem>>, vector<1x8x128xf32>
    %19 = vector.shape_cast %18 : vector<1x8x128xf32> to vector<8x128xf32>
    %20 = vector.shape_cast %17 : vector<8x128xf32> to vector<1x8x128xf32>
    tpu.vector_store %arg3[%c0_7, %c0_8, %c0_9], %20 {strides = array<i32>} : memref<1x8x128xf32, #tpu.memory_space<vmem>>, vector<1x8x128xf32>,
    %21 = arith.extui %13 : vector<16x128xi1> to vector<16x128xi32>
    %22 = vector.shape_cast %21 : vector<16x128xi32> to vector<2x8x128xi32>
    %cst_10 = arith.constant dense<0> : vector<8x128xi32>
    %23 = vector.multi_reduction <add>, %22, %cst_10 [0] : vector<2x8x128xi32> to vector<8x128xi32>
    %c0_11 = arith.constant 0 : index
    %c0_12 = arith.constant 0 : index
    %c0_13 = arith.constant 0 : index
    %24 = vector.load %arg4[%c0_11, %c0_12, %c0_13] : memref<1x8x128xi32, #tpu.memory_space<vmem>>, vector<1x8x128xi32>
    %25 = vector.shape_cast %24 : vector<1x8x128xi32> to vector<8x128xi32>
    %26 = vector.shape_cast %23 : vector<8x128xi32> to vector<1x8x128xi32>
    tpu.vector_store %arg4[%c0_11, %c0_12, %c0_13], %26 {strides = array<i32>} : memref<1x8x128xi32, #tpu.memory_space<vmem>>, vector<1x8x128xi32>,
    return
  }
  func.func @transform_0(%arg0: i32) -> (i32, i32) {
    %c0_i32 = arith.constant 0 : i32
    %c0_i32_0 = arith.constant 0 : i32
    return %arg0, %c0_i32 : i32, i32
  }
  func.func @transform_1(%arg0: i32) -> (i32, i32) {
    %c0_i32 = arith.constant 0 : i32
    %c0_i32_0 = arith.constant 0 : i32
    return %arg0, %c0_i32 : i32, i32
  }
  func.func @transform_2(%arg0: i32) -> (i32, i32, i32) {
    %c0_i32 = arith.constant 0 : i32
    %c0_i32_0 = arith.constant 0 : i32
    %c0_i32_1 = arith.constant 0 : i32
    return %arg0, %c0_i32, %c0_i32_0 : i32, i32, i32
  }
  func.func @transform_3(%arg0: i32) -> (i32, i32, i32) {
    %c0_i32 = arith.constant 0 : i32
    %c0_i32_0 = arith.constant 0 : i32
    %c0_i32_1 = arith.constant 0 : i32
    return %arg0, %c0_i32, %c0_i32_0 : i32, i32, i32
  }
}

</mosaic_0001>

<llo_original>
// kernel: tpu_custom_call.1
$region0: #{tpu_custom_call.1}
  #allocation0 [shape = 'u32[]', space=smem, size = 0x4, offset = 0x4, fixed_abs, tag = 'smem constant byte address 0x4 - core index']
  #allocation1 [shape = 'u32[72,128]{1,0:T(1,128)}', space=vmem, size = 0x9000, scoped, tag = 'internal scratch']
  %s0 = inlined_call_operand.hbm [shape: f32[16,128], index: 0, kind: input, shape index: {}]
  %s1 = inlined_call_operand.hbm [shape: f32[16,128], index: 1, kind: input, shape index: {}]
  %s2 = inlined_call_operand.hbm [shape: f32[1,8,128], index: 2, kind: output, shape index: {0}]
  %s3 = inlined_call_operand.hbm [shape: s32[1,8,128], index: 3, kind: output, shape index: {1}]
  %4 = xla_tuple %s2, %s3
  %s5 = sld [smem:[#allocation0]]
  $region34: #{tpu_custom_call.1} parent=0
    _
  %s7 = ssub.s32 1, %s5
  %s8 = scalar_select 0, %s7, %s5
  $region1: #{tpu_custom_call.1} parent=0
    #allocation2 [shape = 'u8[8192]{0}', space=vmem, size = 0x2000, scoped, tag = 'input window, operand 0, single buffered']
    #allocation3 [shape = 's32[1]{0}', space=sflag, size = 0x4, scoped, tag = 'scoped memory for tpu_custom_call.1']
    #allocation4 [shape = 's32[1]{0}', space=sflag, size = 0x4, scoped, tag = 'scoped memory for tpu_custom_call.1']
    #allocation5 [shape = 'u8[8192]{0}', space=vmem, size = 0x2000, scoped, tag = 'input window, operand 1, single buffered']
    #allocation6 [shape = 's32[1]{0}', space=sflag, size = 0x4, scoped, tag = 'scoped memory for tpu_custom_call.1']
    #allocation7 [shape = 'u8[4096]{0}', space=vmem, size = 0x1000, scoped, tag = 'output window, operand 0, single buffered']
    #allocation8 [shape = 'u8[4096]{0}', space=vmem, size = 0x1000, scoped, tag = 'output window, operand 1, single buffered']
    #allocation9 [shape = 's32[1]{0}', space=sflag, size = 0x4, scoped, tag = 'scoped memory for tpu_custom_call.1']
    %9 = vsyncpa [#allocation3], 0
    %10 = vsyncpa [#allocation6], 0
    %11 = vsyncpa [#allocation4], 0
    %12 = vsyncpa [#allocation9], 0
    // Predicated region
    $region2: #{tpu_custom_call.1} parent=1 // pred_check
      _
    $region3: #{tpu_custom_call.1} parent=1 // pred_check_branch
      %14 = sbr.rel (0) target = $region5
    $region4: #{tpu_custom_call.1} parent=1 // pred_region
      %16 = vsyncadd [#allocation3], 0
      %s17 = sshll.u32 %s0, 4
      %s18 = int_to_ptr.hbm [resolvable:$true] %s17
      %s19 = sshll.u32 [#allocation2], 4
      %s20 = int_to_ptr.vmem [resolvable:$true] %s19
      %25 = dma.hbm_to_vmem [thread:$0]  %s18, 256, %s20, [#allocation3], 128, 128, 8
    $region5: #{tpu_custom_call.1} parent=1 // pred_fallthru
      _
    // Predicated region
    $region6: #{tpu_custom_call.1} parent=1 // pred_check
      _
    $region7: #{tpu_custom_call.1} parent=1 // pred_check_branch
      %27 = sbr.rel (0) target = $region9
    $region8: #{tpu_custom_call.1} parent=1 // pred_region
      %29 = vsyncadd [#allocation6], 0
      %s30 = sshll.u32 %s1, 4
      %s31 = int_to_ptr.hbm [resolvable:$true] %s30
      %s32 = sshll.u32 [#allocation5], 4
      %s33 = int_to_ptr.vmem [resolvable:$true] %s32
      %38 = dma.hbm_to_vmem [thread:$0]  %s31, 256, %s33, [#allocation6], 128, 128, 8
    $region9: #{tpu_custom_call.1} parent=1 // pred_fallthru
      _
    // Predicated region
    $region10: #{tpu_custom_call.1} parent=1 // pred_check
      _
    $region11: #{tpu_custom_call.1} parent=1 // pred_check_branch
      %40 = sbr.rel (0) target = $region13
    $region12: #{tpu_custom_call.1} parent=1 // pred_region
      %42 = dma.done [#allocation3], 256
    $region13: #{tpu_custom_call.1} parent=1 // pred_fallthru
      _
    // Predicated region
    $region14: #{tpu_custom_call.1} parent=1 // pred_check
      _
    $region15: #{tpu_custom_call.1} parent=1 // pred_check_branch
      %44 = sbr.rel (0) target = $region17
    $region16: #{tpu_custom_call.1} parent=1 // pred_region
      %46 = dma.done [#allocation6], 256
    $region17: #{tpu_custom_call.1} parent=1 // pred_fallthru
      _
    %v47 = vld [vmem:[#allocation2] sm:$0xff]
    %v48 = vld [vmem:[#allocation2 + $0x8] sm:$0xff]
    %v49 = vld [vmem:[#allocation5] sm:$0xff]
    %v50 = vld [vmem:[#allocation5 + $0x8] sm:$0xff]
    %v51 = vmax.f32 %v47, 0.0
    %v52 = vmax.f32 %v48, 0.0
    %v53 = vmul.f32 %v47, %v49
    %v54 = vmul.f32 %v48, %v50
    %v55 = vsub.f32 %v51, %v53
    %v56 = vsub.f32 %v52, %v54
    %v57 = vand.u32 2147483647, %v47
    %v58 = vand.u32 2147483647, %v48
    %v59 = vsub.f32 0.0, %v57
    %v60 = vsub.f32 0.0, %v58
    %v61 = vmul.f32 %v59, 1.442695
    %v62 = vpow.pop %v61
    %v63 = vmul.f32 %v60, 1.442695
    %v64 = vpow.pop %v63
    %v65 = vadd.f32 %v62, 1.0
    %v66 = vlog2.pop %v65
    %v67 = vmul.f32 %v66, 0.6931472
    %v68 = vmul.f32 -0.5, %v62
    %v69 = vadd.f32 %v68, 1.0
    %v70 = vmul.f32 %v69, %v62
    %v71 = vand.u32 2147483647, %v62
    %vm72 = vcmp.lt.f32.partialorder %v71, 0.0004427343
    %v73 = vsel %vm72, %v70, %v67
    %v74 = vadd.f32 %v64, 1.0
    %v75 = vlog2.pop %v74
    %v76 = vmul.f32 %v75, 0.6931472
    %v77 = vmul.f32 -0.5, %v64
    %v78 = vadd.f32 %v77, 1.0
    %v79 = vmul.f32 %v78, %v64
    %v80 = vand.u32 2147483647, %v64
    %vm81 = vcmp.lt.f32.partialorder %v80, 0.0004427343
    %v82 = vsel %vm81, %v79, %v76
    %v83 = vadd.f32 %v55, %v73
    %v84 = vadd.f32 %v56, %v82
    %vm85 = vcmp.gt.f32.partialorder %v83, 0.35667494
    %vm86 = vcmp.gt.f32.partialorder %v84, 0.35667494
    %v87 = vsel %vm85, %v83, 0.0
    %v88 = vsel %vm86, %v84, 0.0
    %v89 = vadd.f32 %v87, %v88
    %90 = vst [vmem:[#allocation7] sm:$0xff] %v89
    %v91 = vsel %vm85, 1, 0
    %v92 = vsel %vm86, 1, 0
    %v93 = vadd.s32 %v91, %v92
    %94 = vst [vmem:[#allocation8] sm:$0xff] %v93
    // Predicated region
    $region18: #{tpu_custom_call.1} parent=1 // pred_check
      _
    $region19: #{tpu_custom_call.1} parent=1 // pred_check_branch
      %96 = sbr.rel (0) target = $region21
    $region20: #{tpu_custom_call.1} parent=1 // pred_region
      %98 = vsyncadd [#allocation4], 0
      %s100 = sshll.u32 [#allocation7], 4
      %s101 = int_to_ptr.vmem [resolvable:$true] %s100
      %s102 = sshll.u32 %s2, 4
      %s103 = int_to_ptr.hbm [resolvable:$true] %s102
      %105 = dma.vmem_to_hbm [thread:$0]  %s101, 128, %s103, [#allocation4]
    $region21: #{tpu_custom_call.1} parent=1 // pred_fallthru
      _
    // Predicated region
    $region22: #{tpu_custom_call.1} parent=1 // pred_check
      _
    $region23: #{tpu_custom_call.1} parent=1 // pred_check_branch
      %107 = sbr.rel (0) target = $region25
    $region24: #{tpu_custom_call.1} parent=1 // pred_region
      %109 = vsyncadd [#allocation9], 0
      %s111 = sshll.u32 [#allocation8], 4
      %s112 = int_to_ptr.vmem [resolvable:$true] %s111
      %s113 = sshll.u32 %s3, 4
      %s114 = int_to_ptr.hbm [resolvable:$true] %s113
      %116 = dma.vmem_to_hbm [thread:$0]  %s112, 128, %s114, [#allocation9]
    $region25: #{tpu_custom_call.1} parent=1 // pred_fallthru
      _
    // Predicated region
    $region26: #{tpu_custom_call.1} parent=1 // pred_check
      _
    $region27: #{tpu_custom_call.1} parent=1 // pred_check_branch
      %118 = sbr.rel (0) target = $region29
    $region28: #{tpu_custom_call.1} parent=1 // pred_region
      %120 = dma.done [#allocation4], 128
    $region29: #{tpu_custom_call.1} parent=1 // pred_fallthru
      _
    // Predicated region
    $region30: #{tpu_custom_call.1} parent=1 // pred_check
      _
    $region31: #{tpu_custom_call.1} parent=1 // pred_check_branch
      %122 = sbr.rel (0) target = $region33
    $region32: #{tpu_custom_call.1} parent=1 // pred_region
      %124 = dma.done [#allocation9], 128
    $region33: #{tpu_custom_call.1} parent=1 // pred_fallthru
      _
    %125 = vsyncpa [#allocation3], 1
    %126 = vsyncpa [#allocation6], 1
    %127 = vsyncpa [#allocation4], 1
    %128 = vsyncpa [#allocation9], 1

</llo_original>
